<compile_context>
chip_gen: v7x
topology: tpu7x:2x2x1
jax: 0.10.0
libtpu: 0.0.40
codegen_flags: <defaults>
</compile_context>

<pallas_src>
import functools

import jax
import jax.numpy as jnp
from jax.experimental import pallas as pl
from jax.experimental.pallas import tpu as pltpu

# MXU operand dtype (accumulation is always f32 via preferred_element_type).
MATMUL_DTYPE = jnp.bfloat16


def _make_fused_gcn_kernel(d_ins):
    """Build a kernel running len(d_ins) GCN layers over the flattened batch."""
    num_layers = len(d_ins)
    offs = [0]
    for d in d_ins:
        offs.append(offs[-1] + d)

    def kernel(adj_ref, x_ref, w_ref, b_ref, o_ref, msum_ref):
        adj = adj_ref[...]                       # (BS, BS) f32, block-diagonal
        adj_mm = adj.astype(MATMUL_DTYPE)        # bf16 MXU operand (0/1 exact)
        x_mm = x_ref[...]                        # (BS, Din) bf16
        x = x_mm.astype(jnp.float32)             # f32 activations
        w_all = w_ref[...]                       # (sum d_in, Dm) bf16 (= W_l.T stacked)
        b_all = b_ref[...]                       # (L, Dm) f32 (= 2 * bias_l)

        # denom = adj.sum(2) + 1 is layer-invariant; mask sum reuses the
        # resident adjacency (adj.sum(2) + adj.sum(1), block-diag => per-batch
        # row/col sums are exactly the flattened rows/cols here).
        rowsum = jnp.sum(adj, axis=1, keepdims=True)       # (BS, 1)  == adj.sum(2)
        colsum = jnp.sum(adj.T, axis=1, keepdims=True)     # (BS, 1)  == adj.sum(1)
        msum_ref[...] = rowsum + colsum
        inv_denom = pl.reciprocal(rowsum + 1.0, approx=True)   # EUP slot

        for l in range(num_layers):
            wt = w_all[offs[l]:offs[l + 1], :]   # (d_in_l, Dm) bf16, static slice
            b2 = b_all[l:l + 1, :]               # (1, Dm) f32   (= 2 * bias)

            # Ax = adj.bmm(x)  -> single 2D MXU matmul on the block-diag adj.
            ax = jnp.dot(adj_mm, x_mm, preferred_element_type=jnp.float32)
            # W(Ax) + W(x) == (Ax + x) @ W.T + 2*b   (single MXU pass)
            h = jnp.dot((ax + x).astype(MATMUL_DTYPE), wt,
                        preferred_element_type=jnp.float32) + b2
            # AxW / denom, then ReLU  (gcn_drop is identity in eval mode)
            x = jnp.maximum(h * inv_denom, 0.0)
            x_mm = x.astype(MATMUL_DTYPE)

        o_ref[...] = x

    return kernel


def prepare_gcn_weights(weights, biases):
    """One-time parameter prep: transpose, pre-double biases, pack, cast.

    weights[l]: torch-style Linear weight (Dm, d_in_l); biases[l]: (Dm,).
    Returns (wt_all (sum d_in, Dm) bf16, b2_all (L, Dm) f32, d_ins tuple).
    """
    wt_all = jnp.concatenate(
        [jnp.asarray(w, jnp.float32).T for w in weights], axis=0
    ).astype(MATMUL_DTYPE)
    b2_all = jnp.stack([2.0 * jnp.asarray(b, jnp.float32) for b in biases], axis=0)
    d_ins = tuple(int(w.shape[1]) for w in weights)
    return wt_all, b2_all, d_ins


@functools.partial(jax.jit, static_argnums=(4,))
def gcn_layers_fused(adj, x0, wt_all, b2_all, d_ins):
    """Run all GCN layers (and the mask reduction) in one gridless Pallas call."""
    B, S, Din = x0.shape
    Dm = wt_all.shape[1]
    BS = B * S

    # Block-diagonal adjacency: fold the batch into M/K so the kernel uses
    # plain 2D matmuls.  O((B*S)^2) memory -> fine here (4 KiB); for large
    # B*S keep a batched einsum / grid over B instead.
    eye_b = jnp.eye(B, dtype=jnp.float32)
    adj_f32 = adj.astype(jnp.float32)
    adj_bd = jnp.einsum("bc,bij->bicj", eye_b, adj_f32).reshape(BS, BS)

    x_flat = x0.reshape(BS, Din).astype(MATMUL_DTYPE)

    flops = 0
    for d_in in d_ins:
        flops += 2 * BS * BS * d_in      # adj_bd @ x
        flops += 2 * BS * d_in * Dm      # (ax + x) @ W.T
    bytes_accessed = (4 * BS * BS + 2 * BS * Din + 2 * int(wt_all.size)
                      + 4 * int(b2_all.size) + 4 * BS * Dm + 4 * BS)

    kernel = _make_fused_gcn_kernel(d_ins)
    vmem_spec = pl.BlockSpec(memory_space=pltpu.MemorySpace.VMEM)

    out, msum = pl.pallas_call(
        kernel,
        out_shape=(jax.ShapeDtypeStruct((BS, Dm), jnp.float32),
                   jax.ShapeDtypeStruct((BS, 1), jnp.float32)),
        in_specs=[vmem_spec, vmem_spec, vmem_spec, vmem_spec],
        out_specs=(vmem_spec, vmem_spec),
        cost_estimate=pl.CostEstimate(flops=flops, transcendentals=BS,
                                      bytes_accessed=int(bytes_accessed)),
    )(adj_bd, x_flat, wt_all, b2_all)

    mask = (msum == 0.0).reshape(B, S, 1)
    return out.reshape(B, S, Dm), mask


def gcn_forward(adj, words, pos, ner, params):
    """Forward pass of GCN (eval mode: dropouts identity, no rnn)."""
    # embedding lookups + concat (plain-JAX glue)
    word_embs = jnp.take(params["emb"], words, axis=0)        # (B,S,emb_dim)
    pos_embs = jnp.take(params["pos_emb"], pos, axis=0)       # (B,S,pos_dim)
    ner_embs = jnp.take(params["ner_emb"], ner, axis=0)       # (B,S,ner_dim)
    gcn_inputs = jnp.concatenate([word_embs, pos_embs, ner_embs], axis=2)

    out, mask = gcn_layers_fused(adj, gcn_inputs,
                                 params["wt_all"], params["b2_all"],
                                 params["d_ins"])
    return out, mask


def gcn_forward_ref(adj, words, pos, ner, params):
    """Pure-JAX f32 reference matching the PyTorch module exactly."""
    word_embs = jnp.take(params["emb"], words, axis=0)
    pos_embs = jnp.take(params["pos_emb"], pos, axis=0)
    ner_embs = jnp.take(params["ner_emb"], ner, axis=0)
    x = jnp.concatenate([word_embs, pos_embs, ner_embs], axis=2)
    denom = adj.sum(2)[..., None] + 1.0
    mask = ((adj.sum(2) + adj.sum(1)) == 0)[..., None]
    for (w, b) in zip(params["W_weights"], params["W_biases"]):
        ax = jnp.einsum("bij,bjd->bid", adj, x)
        axw = ax @ w.T + b
        axw = axw + (x @ w.T + b)
        axw = axw / denom
        x = jax.nn.relu(axw)
    return x, mask


if __name__ == "__main__":
    # opt: emb_dim=24, pos_dim=4, ner_dim=4  -> in_dim=32; mem_dim=32; layers=2
    B, S = 2, 16
    emb_dim, pos_dim, ner_dim = 24, 4, 4
    in_dim = emb_dim + pos_dim + ner_dim
    mem_dim, num_layers = 32, 2
    n_words, n_pos, n_ner = 50, 10, 8

    key = jax.random.PRNGKey(0)
    ks = jax.random.split(key, 10)

    params = {
        "emb": jax.random.normal(ks[0], (n_words, emb_dim), jnp.float32) * 0.1,
        "pos_emb": jax.random.normal(ks[1], (n_pos, pos_dim), jnp.float32) * 0.1,
        "ner_emb": jax.random.normal(ks[2], (n_ner, ner_dim), jnp.float32) * 0.1,
        "W_weights": [],
        "W_biases": [],
    }
    for l in range(num_layers):
        d_in = in_dim if l == 0 else mem_dim
        params["W_weights"].append(
            jax.random.normal(ks[3 + l], (mem_dim, d_in), jnp.float32) * 0.1)
        params["W_biases"].append(
            jax.random.normal(ks[5 + l], (mem_dim,), jnp.float32) * 0.1)

    # one-time parameter prep for the kernel (transpose / pack / 2*b / bf16 cast)
    wt_all, b2_all, d_ins = prepare_gcn_weights(params["W_weights"],
                                                params["W_biases"])
    params["wt_all"], params["b2_all"], params["d_ins"] = wt_all, b2_all, d_ins

    # inputs
    words = jax.random.randint(ks[7], (B, S), 0, n_words)
    pos = jax.random.randint(ks[8], (B, S), 0, n_pos)
    ner = jax.random.randint(ks[9], (B, S), 0, n_ner)
    adj = (jax.random.uniform(jax.random.fold_in(key, 42), (B, S, S)) < 0.3
           ).astype(jnp.float32)

    out, mask = gcn_forward(adj, words, pos, ner, params)
    out = jax.block_until_ready(out)
    mask = jax.block_until_ready(mask)

    out_ref, mask_ref = gcn_forward_ref(adj, words, pos, ner, params)
    assert out.shape == (B, S, mem_dim)
    assert mask.shape == (B, S, 1)
    # Tolerance accounts for bf16 MXU operands (f32 accumulate) and the
    # approx (EUP) reciprocal; adj is 0/1-valued so mask/denom are exact.
    assert jnp.allclose(out, out_ref, atol=1e-2, rtol=2e-2), (
        float(jnp.max(jnp.abs(out - out_ref))))
    assert jnp.array_equal(mask, mask_ref)

    print("KERNEL_OK")
</pallas_src>

<mosaic_0001>
module attributes {stable_mosaic.version = 11 : i64} {
  func.func @kernel(%arg0: memref<32x32xf32, #tpu.memory_space<vmem>>, %arg1: memref<32x32xbf16, #tpu.memory_space<vmem>>, %arg2: memref<64x32xbf16, #tpu.memory_space<vmem>>, %arg3: memref<2x32xf32, #tpu.memory_space<vmem>>, %arg4: memref<32x32xf32, #tpu.memory_space<vmem>>, %arg5: memref<32x1xf32, #tpu.memory_space<vmem>>) attributes {dimension_semantics = [], scalar_prefetch = 0 : i64, scratch_operands = 0 : i64, tpu.core_type = #tpu.core_type<tc>} {
    %c0 = arith.constant 0 : index
    %c0_0 = arith.constant 0 : index
    %0 = vector.load %arg0[%c0, %c0_0] : memref<32x32xf32, #tpu.memory_space<vmem>>, vector<32x32xf32>
    %1 = arith.truncf %0 : vector<32x32xf32> to vector<32x32xbf16>
    %c0_1 = arith.constant 0 : index
    %c0_2 = arith.constant 0 : index
    %2 = vector.load %arg1[%c0_1, %c0_2] : memref<32x32xbf16, #tpu.memory_space<vmem>>, vector<32x32xbf16>
    %3 = arith.extf %2 : vector<32x32xbf16> to vector<32x32xf32>
    %c0_3 = arith.constant 0 : index
    %c0_4 = arith.constant 0 : index
    %4 = vector.load %arg2[%c0_3, %c0_4] : memref<64x32xbf16, #tpu.memory_space<vmem>>, vector<64x32xbf16>
    %c0_5 = arith.constant 0 : index
    %c0_6 = arith.constant 0 : index
    %5 = vector.load %arg3[%c0_5, %c0_6] : memref<2x32xf32, #tpu.memory_space<vmem>>, vector<2x32xf32>
    %cst = arith.constant dense<0.000000e+00> : vector<32xf32>
    %6 = vector.multi_reduction <add>, %0, %cst [1] : vector<32x32xf32> to vector<32xf32>
    %7 = vector.shape_cast %6 : vector<32xf32> to vector<32x1xf32>
    %8 = tpu.transpose %0, [1, 0] : vector<32x32xf32> -> vector<32x32xf32>
    %cst_7 = arith.constant dense<0.000000e+00> : vector<32xf32>
    %9 = vector.multi_reduction <add>, %8, %cst_7 [1] : vector<32x32xf32> to vector<32xf32>
    %10 = vector.shape_cast %9 : vector<32xf32> to vector<32x1xf32>
    %11 = arith.addf %7, %10 : vector<32x1xf32>
    %c0_8 = arith.constant 0 : index
    %c0_9 = arith.constant 0 : index
    %12 = vector.load %arg5[%c0_8, %c0_9] : memref<32x1xf32, #tpu.memory_space<vmem>>, vector<32x1xf32>
    tpu.vector_store %arg5[%c0_8, %c0_9], %11 {strides = array<i32>} : memref<32x1xf32, #tpu.memory_space<vmem>>, vector<32x1xf32>,
    %cst_10 = arith.constant 1.000000e+00 : f32
    %13 = vector.broadcast %cst_10 : f32 to vector<32x1xf32>
    %14 = arith.addf %7, %13 : vector<32x1xf32>
    %15 = tpu.reciprocal %14 {approx = true} : vector<32x1xf32> -> vector<32x1xf32>
    %16 = vector.extract_strided_slice %4 {offsets = [0, 0], sizes = [32, 32], strides = [1, 1]} : vector<64x32xbf16> to vector<32x32xbf16>
    %17 = vector.extract_strided_slice %5 {offsets = [0, 0], sizes = [1, 32], strides = [1, 1]} : vector<2x32xf32> to vector<1x32xf32>
    %cst_11 = arith.constant dense<0.000000e+00> : vector<32x32xf32>
    %18 = tpu.matmul %1, %2, %cst_11 {dimension_numbers = #tpu.dot_dimension_numbers<[1], [0], [0], [1], [0, 0, 1, 1], [], []>} : vector<32x32xbf16>, vector<32x32xbf16>, vector<32x32xf32> -> vector<32x32xf32>
    %19 = arith.addf %18, %3 : vector<32x32xf32>
    %20 = arith.truncf %19 : vector<32x32xf32> to vector<32x32xbf16>
    %cst_12 = arith.constant dense<0.000000e+00> : vector<32x32xf32>
    %21 = tpu.matmul %20, %16, %cst_12 {dimension_numbers = #tpu.dot_dimension_numbers<[1], [0], [0], [1], [0, 0, 1, 1], [], []>} : vector<32x32xbf16>, vector<32x32xbf16>, vector<32x32xf32> -> vector<32x32xf32>
    %22 = vector.broadcast %17 : vector<1x32xf32> to vector<32x32xf32>
    %23 = arith.addf %21, %22 : vector<32x32xf32>
    %24 = vector.broadcast %15 : vector<32x1xf32> to vector<32x32xf32>
    %25 = arith.mulf %23, %24 : vector<32x32xf32>
    %cst_13 = arith.constant 0.000000e+00 : f32
    %26 = vector.broadcast %cst_13 : f32 to vector<32x32xf32>
    %27 = arith.maximumf %25, %26 : vector<32x32xf32>
    %28 = arith.truncf %27 : vector<32x32xf32> to vector<32x32xbf16>
    %29 = vector.extract_strided_slice %4 {offsets = [32, 0], sizes = [32, 32], strides = [1, 1]} : vector<64x32xbf16> to vector<32x32xbf16>
    %30 = vector.extract_strided_slice %5 {offsets = [1, 0], sizes = [1, 32], strides = [1, 1]} : vector<2x32xf32> to vector<1x32xf32>
    %cst_14 = arith.constant dense<0.000000e+00> : vector<32x32xf32>
    %31 = tpu.matmul %1, %28, %cst_14 {dimension_numbers = #tpu.dot_dimension_numbers<[1], [0], [0], [1], [0, 0, 1, 1], [], []>} : vector<32x32xbf16>, vector<32x32xbf16>, vector<32x32xf32> -> vector<32x32xf32>
    %32 = arith.addf %31, %27 : vector<32x32xf32>
    %33 = arith.truncf %32 : vector<32x32xf32> to vector<32x32xbf16>
    %cst_15 = arith.constant dense<0.000000e+00> : vector<32x32xf32>
    %34 = tpu.matmul %33, %29, %cst_15 {dimension_numbers = #tpu.dot_dimension_numbers<[1], [0], [0], [1], [0, 0, 1, 1], [], []>} : vector<32x32xbf16>, vector<32x32xbf16>, vector<32x32xf32> -> vector<32x32xf32>
    %35 = vector.broadcast %30 : vector<1x32xf32> to vector<32x32xf32>
    %36 = arith.addf %34, %35 : vector<32x32xf32>
    %37 = vector.broadcast %15 : vector<32x1xf32> to vector<32x32xf32>
    %38 = arith.mulf %36, %37 : vector<32x32xf32>
    %cst_16 = arith.constant 0.000000e+00 : f32
    %39 = vector.broadcast %cst_16 : f32 to vector<32x32xf32>
    %40 = arith.maximumf %38, %39 : vector<32x32xf32>
    %c0_17 = arith.constant 0 : index
    %c0_18 = arith.constant 0 : index
    %41 = vector.load %arg4[%c0_17, %c0_18] : memref<32x32xf32, #tpu.memory_space<vmem>>, vector<32x32xf32>
    tpu.vector_store %arg4[%c0_17, %c0_18], %40 {strides = array<i32>} : memref<32x32xf32, #tpu.memory_space<vmem>>, vector<32x32xf32>,
    return
  }
}

</mosaic_0001>

<llo_original>
// kernel: gcn_layers_fused.1
$region0: #{gcn_layers_fused.1}
  #allocation0 [shape = 'u32[]', space=smem, size = 0x4, offset = 0x4, fixed_abs, tag = 'smem constant byte address 0x4 - core index']
  #allocation1 [shape = 'u32[144,128]{1,0:T(1,128)}', space=vmem, size = 0x12000, scoped, tag = 'internal scratch']
  %s0 = inlined_call_operand.vmem [shape: f32[32,32], index: 0, kind: input, shape index: {}]
  %s1 = inlined_call_operand.vmem [shape: bf16[32,32], index: 1, kind: input, shape index: {}]
  %s2 = inlined_call_operand.vmem [shape: bf16[64,32], index: 2, kind: input, shape index: {}]
  %s3 = inlined_call_operand.vmem [shape: f32[2,32], index: 3, kind: input, shape index: {}]
  %s4 = inlined_call_operand.hbm [shape: f32[32,32], index: 4, kind: output, shape index: {0}]
  %s5 = inlined_call_operand.vmem [shape: f32[32,1], index: 5, kind: output, shape index: {1}]
  %6 = xla_tuple %s4, %s5
  %s7 = sld [smem:[#allocation0]]
  $region34: #{gcn_layers_fused.1} parent=0
    _
  %s9 = ssub.s32 1, %s7
  %s10 = scalar_select 0, %s9, %s7
  $region1: #{gcn_layers_fused.1} parent=0
    #allocation2 [shape = 'u8[16384]{0}', space=vmem, size = 0x4000, scoped, tag = 'output window, operand 0, single buffered']
    #allocation3 [shape = 's32[1]{0}', space=sflag, size = 0x4, scoped, tag = 'scoped memory for gcn_layers_fused.1']
    %11 = vsyncpa [#allocation3], 0
    // Predicated region
    $region2: #{gcn_layers_fused.1} parent=1 // pred_check
      _
    $region3: #{gcn_layers_fused.1} parent=1 // pred_check_branch
      %13 = sbr.rel (0) target = $region5
    $region4: #{gcn_layers_fused.1} parent=1 // pred_region
      _
    $region5: #{gcn_layers_fused.1} parent=1 // pred_fallthru
      _
    // Predicated region
    $region6: #{gcn_layers_fused.1} parent=1 // pred_check
      _
    $region7: #{gcn_layers_fused.1} parent=1 // pred_check_branch
      %15 = sbr.rel (0) target = $region9
    $region8: #{gcn_layers_fused.1} parent=1 // pred_region
      _
    $region9: #{gcn_layers_fused.1} parent=1 // pred_fallthru
      _
    // Predicated region
    $region10: #{gcn_layers_fused.1} parent=1 // pred_check
      _
    $region11: #{gcn_layers_fused.1} parent=1 // pred_check_branch
      %17 = sbr.rel (0) target = $region13
    $region12: #{gcn_layers_fused.1} parent=1 // pred_region
      _
    $region13: #{gcn_layers_fused.1} parent=1 // pred_fallthru
      _
    // Predicated region
    $region14: #{gcn_layers_fused.1} parent=1 // pred_check
      _
    $region15: #{gcn_layers_fused.1} parent=1 // pred_check_branch
      %19 = sbr.rel (0) target = $region17
    $region16: #{gcn_layers_fused.1} parent=1 // pred_region
      _
    $region17: #{gcn_layers_fused.1} parent=1 // pred_fallthru
      _
    %v21 = vld [vmem:[%s0] sm:$0xff]
    %v22 = vld [vmem:[%s0 + $0x8] sm:$0xff]
    %v23 = vld [vmem:[%s0 + $0x10] sm:$0xff]
    %v24 = vld [vmem:[%s0 + $0x18] sm:$0xff]
    %v25 = vpack.c.bf16 %v22, %v21
    %v26 = vpack.c.bf16 %v24, %v23
    %v27 = vld [vmem:[%s1] sm:$0xf]
    %v28 = vld [vmem:[%s1 + $0x4] sm:$0xf]
    %v29 = vld [vmem:[%s1 + $0x8] sm:$0xf]
    %v30 = vld [vmem:[%s1 + $0xc] sm:$0xf]
    %v31 = vunpack.c.l.bf16 %v27
    %v32 = vunpack.c.l.bf16 %v28
    %v33 = vunpack.c.l.bf16 %v29
    %v34 = vunpack.c.l.bf16 %v30
    %v35 = vld [vmem:[%s2] sm:$0xf]
    %v36 = vld [vmem:[%s2 + $0x4] sm:$0xf]
    %v37 = vld [vmem:[%s2 + $0x8] sm:$0xf]
    %v38 = vld [vmem:[%s2 + $0xc] sm:$0xf]
    %v39 = vld [vmem:[%s2 + $0x10] sm:$0xf]
    %v40 = vld [vmem:[%s2 + $0x14] sm:$0xf]
    %v41 = vld [vmem:[%s2 + $0x18] sm:$0xf]
    %v42 = vld [vmem:[%s2 + $0x1c] sm:$0xf]
    %v43 = vld [vmem:[%s3] sm:$0x3]
    %vm44 = vcmask 261120
    %v45 = vsel %vm44, %v21, 0.0
    %46 = vadd.xlane.f32.xlu0 %v45
    %v47 = vpop.xlane.xlu0 %46
    %v48 = vsel %vm44, %v22, 0.0
    %49 = vadd.xlane.f32.xlu0 %v48
    %v50 = vpop.xlane.xlu0 %49
    %v51 = vsel %vm44, %v23, 0.0
    %52 = vadd.xlane.f32.xlu0 %v51
    %v53 = vpop.xlane.xlu0 %52
    %v54 = vsel %vm44, %v24, 0.0
    %55 = vadd.xlane.f32.xlu0 %v54
    %v56 = vpop.xlane.xlu0 %55
    %57 = vxpose.xlu0.b32.start [1/16] %v21, 128
    %58 = vxpose.xlu0.b32.cont [2/16] %v22, 128
    %59 = vxpose.xlu0.b32.cont [3/16] %v23, 128
    %60 = vxpose.xlu0.b32.cont [4/16] %v24, 128
    %61 = vxpose.xlu0.b32.cont [5/16] 0.0, 128
    %62 = vxpose.xlu0.b32.cont [6/16] 0.0, 128
    %63 = vxpose.xlu0.b32.cont [7/16] 0.0, 128
    %64 = vxpose.xlu0.b32.cont [8/16] 0.0, 128
    %65 = vxpose.xlu0.b32.cont [9/16] 0.0, 128
    %66 = vxpose.xlu0.b32.cont [10/16] 0.0, 128
    %67 = vxpose.xlu0.b32.cont [11/16] 0.0, 128
    %68 = vxpose.xlu0.b32.cont [12/16] 0.0, 128
    %69 = vxpose.xlu0.b32.cont [13/16] 0.0, 128
    %70 = vxpose.xlu0.b32.cont [14/16] 0.0, 128
    %71 = vxpose.xlu0.b32.cont [15/16] 0.0, 128
    %72 = vxpose.xlu0.b32.end [16/16] 0.0, 128
    %v73 = vpop.trf.xlu0
    %v74 = vpop.trf.xlu0
    %v75 = vpop.trf.xlu0
    %v76 = vpop.trf.xlu0
    %v77 = vpop.trf.xlu0
    %v78 = vpop.trf.xlu0
    %v79 = vpop.trf.xlu0
    %v80 = vpop.trf.xlu0
    %v81 = vpop.trf.xlu0
    %v82 = vpop.trf.xlu0
    %v83 = vpop.trf.xlu0
    %v84 = vpop.trf.xlu0
    %v85 = vpop.trf.xlu0
    %v86 = vpop.trf.xlu0
    %v87 = vpop.trf.xlu0
    %v88 = vpop.trf.xlu0
    %v89 = vsel %vm44, %v73, 0.0
    %90 = vadd.xlane.f32.xlu0 %v89
    %v91 = vpop.xlane.xlu0 %90
    %v92 = vsel %vm44, %v74, 0.0
    %93 = vadd.xlane.f32.xlu0 %v92
    %v94 = vpop.xlane.xlu0 %93
    %v95 = vsel %vm44, %v75, 0.0
    %96 = vadd.xlane.f32.xlu0 %v95
    %v97 = vpop.xlane.xlu0 %96
    %v98 = vsel %vm44, %v76, 0.0
    %99 = vadd.xlane.f32.xlu0 %v98
    %v100 = vpop.xlane.xlu0 %99
    %v101 = vadd.f32 %v47, %v91
    %v102 = vadd.f32 %v50, %v94
    %v103 = vadd.f32 %v53, %v97
    %v104 = vadd.f32 %v56, %v100
    %vm105 = vcmask 7168
    %106 = vst.msk [vmem:[%s5] sm:$0xff] %vm105, %v101
    %107 = vst.msk [vmem:[%s5 + $0x8] sm:$0xff] %vm105, %v102
    %108 = vst.msk [vmem:[%s5 + $0x10] sm:$0xff] %vm105, %v103
    %109 = vst.msk [vmem:[%s5 + $0x18] sm:$0xff] %vm105, %v104
    %v110 = vadd.f32 %v47, 1.0
    %v111 = vadd.f32 %v50, 1.0
    %v112 = vadd.f32 %v53, 1.0
    %v113 = vadd.f32 %v56, 1.0
    %v114 = vrcp.pop %v110
    %v115 = vrcp.pop %v111
    %v116 = vrcp.pop %v112
    %v117 = vrcp.pop %v113
    %v122 = vunpack.c.l.b16 %v27
    %v123 = vunpack.c.l.b16 %v28
    %v124 = vunpack.c.l.b16 %v29
    %v125 = vunpack.c.l.b16 %v30
    %v126 = vpack.c.b16 %v123, %v122
    %v127 = vpack.c.b16 %v125, %v124
    %v131 = vsel %vm44, %v25, 0
    %v134 = vsel %vm44, %v26, 0
    %136 = vmatprep.subr.bf16.mxu0 0
    %137 = vmatpush1.bf16.msra.mxu0 %v126
    %138 = vmatprep.subr.bf16.mxu0 0
    %139 = vmatpush1.bf16.msra.mxu0 %v127
    %140 = vmatprep.subr.bf16.mxu0 0
    %141 = vmatpush1.bf16.msra.mxu0 0
    %142 = vmatprep.subr.bf16.mxu0 0
    %143 = vmatpush1.bf16.msra.mxu0 0
    %144 = vmatprep.subr.bf16.mxu0 0
    %145 = vmatpush1.bf16.msra.mxu0 0
    %146 = vmatprep.subr.bf16.mxu0 0
    %147 = vmatpush1.bf16.msra.mxu0 0
    %148 = vmatprep.subr.bf16.mxu0 0
    %149 = vmatpush1.bf16.msra.mxu0 0
    %150 = vmatprep.subr.bf16.mxu0 0
    %151 = vmatpush1.bf16.msra.mxu0 0
    %152 = vmatprep.subr.bf16.mxu0 0
    %153 = vmatpush1.bf16.msra.mxu0 0
    %154 = vmatprep.subr.bf16.mxu0 0
    %155 = vmatpush1.bf16.msra.mxu0 0
    %156 = vmatprep.subr.bf16.mxu0 0
    %157 = vmatpush1.bf16.msra.mxu0 0
    %158 = vmatprep.subr.bf16.mxu0 0
    %159 = vmatpush1.bf16.msra.mxu0 0
    %160 = vmatprep.subr.bf16.mxu0 0
    %161 = vmatpush1.bf16.msra.mxu0 0
    %162 = vmatprep.subr.bf16.mxu0 0
    %163 = vmatpush1.bf16.msra.mxu0 0
    %164 = vmatprep.subr.bf16.mxu0 0
    %165 = vmatpush1.bf16.msra.mxu0 0
    %166 = vmatprep.subr.bf16.mxu0 0
    %167 = vmatpush1.bf16.msra.mxu0 0
    %168 = vmatprep.mubr.bf16.mxu0 0
    %169 = vmatmul.mubr.bf16.gmra.mrb[0].mxu0 %v131
    %v170 = vpop.f32.mrb[0].mxu0
    %v171 = vadd.f32 %v31, %v170
    %v172 = vpop.f32.mrb[0].mxu0
    %v173 = vpop.f32.mrb[0].mxu0
    %v174 = vadd.f32 %v32, %v173
    %v175 = vpop.f32.mrb[0].mxu0
    %176 = vmatprep.mubr.bf16.mxu0 0
    %177 = vmatmul.mubr.bf16.gmra.mrb[0].mxu0 %v134
    %v178 = vpop.f32.mrb[0].mxu0
    %v179 = vadd.f32 %v33, %v178
    %v180 = vpop.f32.mrb[0].mxu0
    %v181 = vpop.f32.mrb[0].mxu0
    %v182 = vadd.f32 %v34, %v181
    %v183 = vpop.f32.mrb[0].mxu0
    %184 = vdwg.mxu0
    %v185 = vpack.c.bf16 %v174, %v171
    %v186 = vpack.c.bf16 %v182, %v179
    %v187 = vlaneseq
    %v188 = vshrl.u32 %v187, 7
    %v189 = vsub.s32 0, %v188
    %v190 = vrot.slane %v43, %v189
    %v195 = vunpack.c.l.b16 %v35
    %v196 = vunpack.c.l.b16 %v36
    %v197 = vunpack.c.l.b16 %v37
    %v198 = vunpack.c.l.b16 %v38
    %v199 = vpack.c.b16 %v196, %v195
    %v200 = vpack.c.b16 %v198, %v197
    %v204 = vsel %vm44, %v185, 0
    %v207 = vsel %vm44, %v186, 0
    %209 = vmatprep.subr.bf16.mxu0 0
    %210 = vmatpush1.bf16.msra.mxu0 %v199
    %211 = vmatprep.subr.bf16.mxu0 0
    %212 = vmatpush1.bf16.msra.mxu0 %v200
    %213 = vmatprep.subr.bf16.mxu0 0
    %214 = vmatpush1.bf16.msra.mxu0 0
    %215 = vmatprep.subr.bf16.mxu0 0
    %216 = vmatpush1.bf16.msra.mxu0 0
    %217 = vmatprep.subr.bf16.mxu0 0
    %218 = vmatpush1.bf16.msra.mxu0 0
    %219 = vmatprep.subr.bf16.mxu0 0
    %220 = vmatpush1.bf16.msra.mxu0 0
    %221 = vmatprep.subr.bf16.mxu0 0
    %222 = vmatpush1.bf16.msra.mxu0 0
    %223 = vmatprep.subr.bf16.mxu0 0
    %224 = vmatpush1.bf16.msra.mxu0 0
    %225 = vmatprep.subr.bf16.mxu0 0
    %226 = vmatpush1.bf16.msra.mxu0 0
    %227 = vmatprep.subr.bf16.mxu0 0
    %228 = vmatpush1.bf16.msra.mxu0 0
    %229 = vmatprep.subr.bf16.mxu0 0
    %230 = vmatpush1.bf16.msra.mxu0 0
    %231 = vmatprep.subr.bf16.mxu0 0
    %232 = vmatpush1.bf16.msra.mxu0 0
    %233 = vmatprep.subr.bf16.mxu0 0
    %234 = vmatpush1.bf16.msra.mxu0 0
    %235 = vmatprep.subr.bf16.mxu0 0
    %236 = vmatpush1.bf16.msra.mxu0 0
    %237 = vmatprep.subr.bf16.mxu0 0
    %238 = vmatpush1.bf16.msra.mxu0 0
    %239 = vmatprep.subr.bf16.mxu0 0
    %240 = vmatpush1.bf16.msra.mxu0 0
    %241 = vmatprep.mubr.bf16.mxu0 0
    %242 = vmatmul.mubr.bf16.gmra.mrb[0].mxu0 %v204
    %v243 = vpop.f32.mrb[0].mxu0
    %v244 = vadd.f32 %v190, %v243
    %v245 = vpop.f32.mrb[0].mxu0
    %v246 = vpop.f32.mrb[0].mxu0
    %v247 = vadd.f32 %v190, %v246
    %v248 = vpop.f32.mrb[0].mxu0
    %249 = vmatprep.mubr.bf16.mxu0 0
    %250 = vmatmul.mubr.bf16.gmra.mrb[0].mxu0 %v207
    %v251 = vpop.f32.mrb[0].mxu0
    %v252 = vadd.f32 %v190, %v251
    %v253 = vpop.f32.mrb[0].mxu0
    %v254 = vpop.f32.mrb[0].mxu0
    %v255 = vadd.f32 %v190, %v254
    %v256 = vpop.f32.mrb[0].mxu0
    %257 = vdwg.mxu0
    %v258 = vmul.f32 %v244, %v114
    %v259 = vmul.f32 %v247, %v115
    %v260 = vmul.f32 %v252, %v116
    %v261 = vmul.f32 %v255, %v117
    %v262 = vmax.f32 %v258, 0.0
    %v263 = vmax.f32 %v259, 0.0
    %v264 = vmax.f32 %v260, 0.0
    %v265 = vmax.f32 %v261, 0.0
    %v266 = vpack.c.bf16 %v263, %v262
    %v267 = vpack.c.bf16 %v265, %v264
    %268 = vmatprep.subr.bf16.mxu0 0
    %269 = vmatpush1.bf16.msra.mxu0 %v266
    %270 = vmatprep.subr.bf16.mxu0 0
    %271 = vmatpush1.bf16.msra.mxu0 %v267
    %272 = vmatprep.subr.bf16.mxu0 0
    %273 = vmatpush1.bf16.msra.mxu0 0
    %274 = vmatprep.subr.bf16.mxu0 0
    %275 = vmatpush1.bf16.msra.mxu0 0
    %276 = vmatprep.subr.bf16.mxu0 0
    %277 = vmatpush1.bf16.msra.mxu0 0
    %278 = vmatprep.subr.bf16.mxu0 0
    %279 = vmatpush1.bf16.msra.mxu0 0
    %280 = vmatprep.subr.bf16.mxu0 0
    %281 = vmatpush1.bf16.msra.mxu0 0
    %282 = vmatprep.subr.bf16.mxu0 0
    %283 = vmatpush1.bf16.msra.mxu0 0
    %284 = vmatprep.subr.bf16.mxu0 0
    %285 = vmatpush1.bf16.msra.mxu0 0
    %286 = vmatprep.subr.bf16.mxu0 0
    %287 = vmatpush1.bf16.msra.mxu0 0
    %288 = vmatprep.subr.bf16.mxu0 0
    %289 = vmatpush1.bf16.msra.mxu0 0
    %290 = vmatprep.subr.bf16.mxu0 0
    %291 = vmatpush1.bf16.msra.mxu0 0
    %292 = vmatprep.subr.bf16.mxu0 0
    %293 = vmatpush1.bf16.msra.mxu0 0
    %294 = vmatprep.subr.bf16.mxu0 0
    %295 = vmatpush1.bf16.msra.mxu0 0
    %296 = vmatprep.subr.bf16.mxu0 0
    %297 = vmatpush1.bf16.msra.mxu0 0
    %298 = vmatprep.subr.bf16.mxu0 0
    %299 = vmatpush1.bf16.msra.mxu0 0
    %300 = vmatprep.mubr.bf16.mxu0 0
    %301 = vmatmul.mubr.bf16.gmra.mrb[0].mxu0 %v131
    %v302 = vpop.f32.mrb[0].mxu0
    %v303 = vadd.f32 %v262, %v302
    %v304 = vpop.f32.mrb[0].mxu0
    %v305 = vpop.f32.mrb[0].mxu0
    %v306 = vadd.f32 %v263, %v305
    %v307 = vpop.f32.mrb[0].mxu0
    %308 = vmatprep.mubr.bf16.mxu0 0
    %309 = vmatmul.mubr.bf16.gmra.mrb[0].mxu0 %v134
    %v310 = vpop.f32.mrb[0].mxu0
    %v311 = vadd.f32 %v264, %v310
    %v312 = vpop.f32.mrb[0].mxu0
    %v313 = vpop.f32.mrb[0].mxu0
    %v314 = vadd.f32 %v265, %v313
    %v315 = vpop.f32.mrb[0].mxu0
    %316 = vdwg.mxu0
    %v317 = vpack.c.bf16 %v306, %v303
    %v318 = vpack.c.bf16 %v314, %v311
    %v319 = vlaneseq
    %v320 = vshrl.u32 %v319, 7
    %v321 = vsub.s32 1, %v320
    %v322 = vrot.slane %v43, %v321
    %v327 = vunpack.c.l.b16 %v39
    %v328 = vunpack.c.l.b16 %v40
    %v329 = vunpack.c.l.b16 %v41
    %v330 = vunpack.c.l.b16 %v42
    %v331 = vpack.c.b16 %v328, %v327
    %v332 = vpack.c.b16 %v330, %v329
    %v336 = vsel %vm44, %v317, 0
    %v339 = vsel %vm44, %v318, 0
    %341 = vmatprep.subr.bf16.mxu0 0
    %342 = vmatpush1.bf16.msra.mxu0 %v331
    %343 = vmatprep.subr.bf16.mxu0 0
    %344 = vmatpush1.bf16.msra.mxu0 %v332
    %345 = vmatprep.subr.bf16.mxu0 0
    %346 = vmatpush1.bf16.msra.mxu0 0
    %347 = vmatprep.subr.bf16.mxu0 0
    %348 = vmatpush1.bf16.msra.mxu0 0
    %349 = vmatprep.subr.bf16.mxu0 0
    %350 = vmatpush1.bf16.msra.mxu0 0
    %351 = vmatprep.subr.bf16.mxu0 0
    %352 = vmatpush1.bf16.msra.mxu0 0
    %353 = vmatprep.subr.bf16.mxu0 0
    %354 = vmatpush1.bf16.msra.mxu0 0
    %355 = vmatprep.subr.bf16.mxu0 0
    %356 = vmatpush1.bf16.msra.mxu0 0
    %357 = vmatprep.subr.bf16.mxu0 0
    %358 = vmatpush1.bf16.msra.mxu0 0
    %359 = vmatprep.subr.bf16.mxu0 0
    %360 = vmatpush1.bf16.msra.mxu0 0
    %361 = vmatprep.subr.bf16.mxu0 0
    %362 = vmatpush1.bf16.msra.mxu0 0
    %363 = vmatprep.subr.bf16.mxu0 0
    %364 = vmatpush1.bf16.msra.mxu0 0
    %365 = vmatprep.subr.bf16.mxu0 0
    %366 = vmatpush1.bf16.msra.mxu0 0
    %367 = vmatprep.subr.bf16.mxu0 0
    %368 = vmatpush1.bf16.msra.mxu0 0
    %369 = vmatprep.subr.bf16.mxu0 0
    %370 = vmatpush1.bf16.msra.mxu0 0
    %371 = vmatprep.subr.bf16.mxu0 0
    %372 = vmatpush1.bf16.msra.mxu0 0
    %373 = vmatprep.mubr.bf16.mxu0 0
    %374 = vmatmul.mubr.bf16.gmra.mrb[0].mxu0 %v336
    %v375 = vpop.f32.mrb[0].mxu0
    %v376 = vadd.f32 %v322, %v375
    %v377 = vpop.f32.mrb[0].mxu0
    %v378 = vpop.f32.mrb[0].mxu0
    %v379 = vadd.f32 %v322, %v378
    %v380 = vpop.f32.mrb[0].mxu0
    %381 = vmatprep.mubr.bf16.mxu0 0
    %382 = vmatmul.mubr.bf16.gmra.mrb[0].mxu0 %v339
    %v383 = vpop.f32.mrb[0].mxu0
    %v384 = vadd.f32 %v322, %v383
    %v385 = vpop.f32.mrb[0].mxu0
    %v386 = vpop.f32.mrb[0].mxu0
    %v387 = vadd.f32 %v322, %v386
    %v388 = vpop.f32.mrb[0].mxu0
    %389 = vdwg.mxu0
    %v390 = vmul.f32 %v376, %v114
    %v391 = vmul.f32 %v379, %v115
    %v392 = vmul.f32 %v384, %v116
    %v393 = vmul.f32 %v387, %v117
    %v394 = vmax.f32 %v390, 0.0
    %v395 = vmax.f32 %v391, 0.0
    %v396 = vmax.f32 %v392, 0.0
    %v397 = vmax.f32 %v393, 0.0
    %398 = vst.msk [vmem:[#allocation2] sm:$0xff] %vm44, %v394
    %399 = vst.msk [vmem:[#allocation2 + $0x8] sm:$0xff] %vm44, %v395
    %400 = vst.msk [vmem:[#allocation2 + $0x10] sm:$0xff] %vm44, %v396
    %401 = vst.msk [vmem:[#allocation2 + $0x18] sm:$0xff] %vm44, %v397
    // Predicated region
    $region18: #{gcn_layers_fused.1} parent=1 // pred_check
      _
    $region19: #{gcn_layers_fused.1} parent=1 // pred_check_branch
      %403 = sbr.rel (0) target = $region21
    $region20: #{gcn_layers_fused.1} parent=1 // pred_region
      %s405 = ssub.s32 512, 512
      %406 = vsyncadd [#allocation3], %s405
      %s407 = sshll.u32 [#allocation2], 4
      %s408 = int_to_ptr.vmem [resolvable:$true] %s407
      %413 = dma.vmem_to_hbm [thread:$0]  %s408, 512, %s4, [#allocation3], 128, 128, 8
    $region21: #{gcn_layers_fused.1} parent=1 // pred_fallthru
      _
    // Predicated region
    $region22: #{gcn_layers_fused.1} parent=1 // pred_check
      _
    $region23: #{gcn_layers_fused.1} parent=1 // pred_check_branch
      %415 = sbr.rel (0) target = $region25
    $region24: #{gcn_layers_fused.1} parent=1 // pred_region
      _
    $region25: #{gcn_layers_fused.1} parent=1 // pred_fallthru
      _
    // Predicated region
    $region26: #{gcn_layers_fused.1} parent=1 // pred_check
      _
    $region27: #{gcn_layers_fused.1} parent=1 // pred_check_branch
      %417 = sbr.rel (0) target = $region29
    $region28: #{gcn_layers_fused.1} parent=1 // pred_region
      %418 = dma.done [#allocation3], 512
    $region29: #{gcn_layers_fused.1} parent=1 // pred_fallthru
      _
    // Predicated region
    $region30: #{gcn_layers_fused.1} parent=1 // pred_check
      _
    $region31: #{gcn_layers_fused.1} parent=1 // pred_check_branch
      %420 = sbr.rel (0) target = $region33
    $region32: #{gcn_layers_fused.1} parent=1 // pred_region
      _
    $region33: #{gcn_layers_fused.1} parent=1 // pred_fallthru
      _
    %421 = vsyncpa [#allocation3], 1

</llo_original>
